<compile_context>
chip_gen: v7x
topology: tpu7x:2x2x1
jax: 0.10.0
libtpu: 0.0.40
codegen_flags: <defaults>
</compile_context>

<pallas_src>
import functools

import jax
import jax.numpy as jnp
from jax.experimental import pallas as pl
from jax.experimental.pallas import tpu as pltpu


# ----------------------------------------------------------------------------
# Plain-JAX glue: quaternion -> YXY Euler angles -> Wigner-D blocks
# (exact port of pytorch3d.transforms + edf/wigner.py helpers)
# ----------------------------------------------------------------------------
def standardize_quaternion(q):
    return jnp.where(q[..., 0:1] < 0, -q, q)


def quaternion_to_matrix(q):
    r, i, j, k = q[..., 0], q[..., 1], q[..., 2], q[..., 3]
    two_s = 2.0 / jnp.sum(q * q, axis=-1)
    o = jnp.stack(
        [
            1 - two_s * (j * j + k * k),
            two_s * (i * j - k * r),
            two_s * (i * k + j * r),
            two_s * (i * j + k * r),
            1 - two_s * (i * i + k * k),
            two_s * (j * k - i * r),
            two_s * (i * k - j * r),
            two_s * (j * k + i * r),
            1 - two_s * (i * i + j * j),
        ],
        axis=-1,
    )
    return o.reshape(q.shape[:-1] + (3, 3))


def matrix_to_euler_yxy(M):
    # pytorch3d matrix_to_euler_angles(M, 'YXY') specialized (verified against the
    # generic _angle_from_tan path: alpha=atan2(M01,M21), beta=acos(M11),
    # gamma=atan2(M10,-M12)).
    alpha = jnp.arctan2(M[..., 0, 1], M[..., 2, 1])
    beta = jnp.arccos(jnp.clip(M[..., 1, 1], -1.0, 1.0))
    gamma = jnp.arctan2(M[..., 1, 0], -M[..., 1, 2])
    return alpha, beta, gamma


def quat_to_angles(q):
    # NOTE: like the torch original, no epsilon in the norm (zero quaternion -> NaN).
    qn = standardize_quaternion(q / jnp.linalg.norm(q, axis=-1, keepdims=True))
    return matrix_to_euler_yxy(quaternion_to_matrix(qn))


def z_rot_mat(angle, l):
    T = angle.shape[0]
    d = 2 * l + 1
    inds = jnp.arange(d)
    rev = jnp.arange(d - 1, -1, -1)
    freqs = jnp.arange(l, -l - 1, -1, dtype=angle.dtype)
    M = jnp.zeros((T, d, d), dtype=angle.dtype)
    M = M.at[:, inds, rev].set(jnp.sin(freqs[None, :] * angle[:, None]))
    M = M.at[:, inds, inds].set(jnp.cos(freqs[None, :] * angle[:, None]))
    return M


def wigner_D_jax(l, alpha, beta, gamma, J):
    Xa = z_rot_mat(alpha, l)
    Xb = z_rot_mat(beta, l)
    Xc = z_rot_mat(gamma, l)
    return Xa @ J @ Xb @ J @ Xc  # (T, 2l+1, 2l+1)


def _round_up(x, m):
    return ((x + m - 1) // m) * m


def build_transform_blocks(q, ls, muls, Js, C):
    """W[t] = block-diag over irreps of kron(I_mul, D_l(t)^T), shape (T, C, C).

    out[t, q, :] = feature[q, :] @ W[t]  reproduces the torch einsum path.
    """
    alpha, beta, gamma = quat_to_angles(q)
    T = q.shape[0]
    strips = []
    off = 0
    for l, mul, J in zip(ls, muls, Js):
        d = 2 * l + 1
        D = wigner_D_jax(l, alpha, beta, gamma, J)        # (T, d, d)
        Dt = jnp.swapaxes(D, -1, -2)                      # D^T per t
        blk = jnp.einsum("ab,tij->taibj", jnp.eye(mul, dtype=Dt.dtype), Dt)
        blk = blk.reshape(T, mul * d, mul * d)
        left = jnp.zeros((T, mul * d, off), dtype=blk.dtype)
        right = jnp.zeros((T, mul * d, C - off - mul * d), dtype=blk.dtype)
        strips.append(jnp.concatenate([left, blk, right], axis=-1))
        off += mul * d
    return jnp.concatenate(strips, axis=1)                # (T, C, C)


# ----------------------------------------------------------------------------
# Pallas kernel: per Q row tile, apply all T Wigner blocks and write the output
# block directly in the final (T, Q, C) layout (no post-kernel transpose).
# ----------------------------------------------------------------------------
def _apply_kernel(f_ref, w_ref, o_ref):
    # f_ref: (tq, C)   w_ref: (T, C, C)   o_ref: (T, tq, C)
    f = f_ref[...]
    # T is small and static (shape of the block): unrolled per-pose MXU matmuls keep
    # the feature tile resident and write each output plane in its final layout.
    for t in range(w_ref.shape[0]):
        o_ref[t] = jnp.dot(
            f, w_ref[t], preferred_element_type=jnp.float32
        ).astype(o_ref.dtype)


def apply_transform_pallas(feature, W, *, out_dtype=None, tq_target=1024):
    """out[t, q, c] = sum_j feature[q, j] * W[t, j, c], returned as (T, Q, C)."""
    Q, C = feature.shape
    T = W.shape[0]
    out_dtype = jnp.dtype(out_dtype if out_dtype is not None else feature.dtype)

    # --- Cap the Q row tile so the double-buffered blocks stay well inside the
    #     scoped-VMEM budget on every generation (v5e default 16 MiB scoped,
    #     v7x 64 MiB physical).
    budget = 12 * 1024 * 1024
    per_row = 2 * C * (feature.dtype.itemsize + T * out_dtype.itemsize)
    w_bytes = 2 * T * C * C * W.dtype.itemsize
    tq_cap = max(8, (max(budget - w_bytes, 0) // max(per_row, 1)) // 8 * 8)
    tq_target = max(8, min(tq_target, tq_cap))

    # --- Q tiling: minimal padding (<8 rows per tile, not up to a full tile) and an
    #     even number of tiles (>=2 when Q allows) so both v7x TensorCores balance.
    n_tiles = pl.cdiv(Q, tq_target)
    if Q >= 16:
        n_tiles = max(2, n_tiles)
        n_tiles += n_tiles % 2
    tq = _round_up(pl.cdiv(Q, n_tiles), 8)
    Qpad = n_tiles * tq
    if Qpad > Q:
        feature = jnp.pad(feature, ((0, Qpad - Q), (0, 0)))

    out = pl.pallas_call(
        _apply_kernel,
        out_shape=jax.ShapeDtypeStruct((T, Qpad, C), out_dtype),
        grid_spec=pltpu.PrefetchScalarGridSpec(
            num_scalar_prefetch=0,
            grid=(n_tiles,),
            in_specs=[
                # feature tile: fetched exactly once per Q tile.
                pl.BlockSpec((tq, C), lambda qi: (qi, 0)),
                # W: constant block index -> fetched once, VMEM resident.
                pl.BlockSpec((T, C, C), lambda qi: (0, 0, 0)),
            ],
            out_specs=pl.BlockSpec((T, tq, C), lambda qi: (0, qi, 0)),
        ),
        compiler_params=pltpu.CompilerParams(
            dimension_semantics=("parallel",),
            vmem_limit_bytes=48 * 1024 * 1024,  # safe on v7x (64 MiB physical)
        ),
    )(feature, W)

    # Slice off the (<= ~8 * n_tiles) padded rows only when padding was needed.
    if Qpad > Q:
        out = out[:, :Q, :]
    return out


@functools.partial(jax.jit, static_argnames=("ls", "muls", "out_dtype"))
def transform_feature_quaternion(feature, q, ls, muls, Js, out_dtype=None):
    """Forward pass of edf.wigner.TransformFeatureQuaternion -> (T, Q, C)."""
    _, C = feature.shape
    W = build_transform_blocks(q, ls, muls, Js, C)
    # TODO(synk): pass out_dtype=jnp.bfloat16 when the consumer tolerates it -- the
    # kernel is HBM-store bound so bf16 output roughly halves its runtime.
    return apply_transform_pallas(feature, W, out_dtype=out_dtype)


# ----------------------------------------------------------------------------
# Pure-JAX reference (direct port of the torch einsum path) for verification
# ----------------------------------------------------------------------------
def reference_forward(feature, q, ls, muls, Js):
    alpha, beta, gamma = quat_to_angles(q)
    outs = []
    off = 0
    for l, mul, J in zip(ls, muls, Js):
        d = 2 * l + 1
        fsl = feature[:, off:off + mul * d].reshape(feature.shape[0], mul, d)
        D = wigner_D_jax(l, alpha, beta, gamma, J)
        ft = jnp.einsum("tij,qmj->tqmi", D, fsl)
        outs.append(ft.reshape(ft.shape[0], ft.shape[1], -1))
        off += mul * d
    return jnp.concatenate(outs, axis=-1)


if __name__ == "__main__":
    key = jax.random.PRNGKey(0)
    k_feat, k_quat, k_J, k_feat2, k_quat2 = jax.random.split(key, 5)

    # Synthetic irreps: "4x0e + 4x1o + 4x2e" -> ls, multiplicities, C = 4+12+20 = 36
    ls = (0, 1, 2)
    muls = (4, 4, 4)
    C = sum(m * (2 * l + 1) for m, l in zip(muls, ls))  # 36
    Q, T = 16, 4

    feature = jax.random.normal(k_feat, (Q, C), dtype=jnp.float32)
    q = jax.random.normal(k_quat, (T, 4), dtype=jnp.float32)

    # TODO(synk): real module registers e3nn `_Jd[l]` constant tables as buffers;
    # here the J_l buffers (shape (2l+1, 2l+1)) are initialized deterministically.
    Js = tuple(
        jax.random.normal(jax.random.fold_in(k_J, l), (2 * l + 1, 2 * l + 1),
                          dtype=jnp.float32)
        for l in ls
    )

    out = transform_feature_quaternion(feature, q, ls=ls, muls=muls, Js=Js)
    out = jax.block_until_ready(out)
    ref = reference_forward(feature, q, ls, muls, Js)
    assert out.shape == (T, Q, C), out.shape
    assert jnp.allclose(out, ref, atol=1e-4, rtol=1e-4), "mismatch vs reference"

    # Second case exercising the minimal-padding / trailing-slice path (Q % 8 != 0).
    Q2, T2 = 19, 3
    feature2 = jax.random.normal(k_feat2, (Q2, C), dtype=jnp.float32)
    q2 = jax.random.normal(k_quat2, (T2, 4), dtype=jnp.float32)
    out2 = transform_feature_quaternion(feature2, q2, ls=ls, muls=muls, Js=Js)
    out2 = jax.block_until_ready(out2)
    ref2 = reference_forward(feature2, q2, ls, muls, Js)
    assert out2.shape == (T2, Q2, C), out2.shape
    assert jnp.allclose(out2, ref2, atol=1e-4, rtol=1e-4), "mismatch (padded Q path)"

    print("KERNEL_OK")
</pallas_src>

<mosaic_0001>
module attributes {stable_mosaic.version = 11 : i64} {
  func.func @_apply_kernel(%arg0: i32, %arg1: memref<8x36xf32, #tpu.memory_space<vmem>>, %arg2: memref<4x36x36xf32, #tpu.memory_space<vmem>>, %arg3: memref<4x8x36xf32, #tpu.memory_space<vmem>>) attributes {dimension_semantics = [#tpu.dimension_semantics<parallel>], iteration_bounds = array<i64: 2>, scalar_prefetch = 0 : i64, scratch_operands = 0 : i64, tpu.core_type = #tpu.core_type<tc>, window_params = [{transform_indices = @transform_0, window_bounds = array<i64: 8, 36>}, {pipeline_mode = #tpu.pipeline_mode<synchronous>, transform_indices = @transform_1, window_bounds = array<i64: 4, 36, 36>}, {transform_indices = @transform_2, window_bounds = array<i64: 4, 8, 36>}]} {
    %c0 = arith.constant 0 : index
    %c0_0 = arith.constant 0 : index
    %0 = vector.load %arg1[%c0, %c0_0] : memref<8x36xf32, #tpu.memory_space<vmem>>, vector<8x36xf32>
    %c0_1 = arith.constant 0 : index
    %c0_2 = arith.constant 0 : index
    %c0_3 = arith.constant 0 : index
    %1 = vector.load %arg2[%c0_1, %c0_2, %c0_3] : memref<4x36x36xf32, #tpu.memory_space<vmem>>, vector<1x36x36xf32>
    %2 = vector.shape_cast %1 : vector<1x36x36xf32> to vector<36x36xf32>
    %cst = arith.constant dense<0.000000e+00> : vector<8x36xf32>
    %3 = tpu.matmul %0, %2, %cst {dimension_numbers = #tpu.dot_dimension_numbers<[1], [0], [0], [1], [0, 0, 1, 1], [], []>} : vector<8x36xf32>, vector<36x36xf32>, vector<8x36xf32> -> vector<8x36xf32>
    %c0_4 = arith.constant 0 : index
    %c0_5 = arith.constant 0 : index
    %c0_6 = arith.constant 0 : index
    %4 = vector.load %arg3[%c0_4, %c0_5, %c0_6] : memref<4x8x36xf32, #tpu.memory_space<vmem>>, vector<1x8x36xf32>
    %5 = vector.shape_cast %4 : vector<1x8x36xf32> to vector<8x36xf32>
    %6 = vector.shape_cast %3 : vector<8x36xf32> to vector<1x8x36xf32>
    tpu.vector_store %arg3[%c0_4, %c0_5, %c0_6], %6 {strides = array<i32>} : memref<4x8x36xf32, #tpu.memory_space<vmem>>, vector<1x8x36xf32>,
    %c1 = arith.constant 1 : index
    %c0_7 = arith.constant 0 : index
    %c0_8 = arith.constant 0 : index
    %7 = vector.load %arg2[%c1, %c0_7, %c0_8] : memref<4x36x36xf32, #tpu.memory_space<vmem>>, vector<1x36x36xf32>
    %8 = vector.shape_cast %7 : vector<1x36x36xf32> to vector<36x36xf32>
    %cst_9 = arith.constant dense<0.000000e+00> : vector<8x36xf32>
    %9 = tpu.matmul %0, %8, %cst_9 {dimension_numbers = #tpu.dot_dimension_numbers<[1], [0], [0], [1], [0, 0, 1, 1], [], []>} : vector<8x36xf32>, vector<36x36xf32>, vector<8x36xf32> -> vector<8x36xf32>
    %c1_10 = arith.constant 1 : index
    %c0_11 = arith.constant 0 : index
    %c0_12 = arith.constant 0 : index
    %10 = vector.load %arg3[%c1_10, %c0_11, %c0_12] : memref<4x8x36xf32, #tpu.memory_space<vmem>>, vector<1x8x36xf32>
    %11 = vector.shape_cast %10 : vector<1x8x36xf32> to vector<8x36xf32>
    %12 = vector.shape_cast %9 : vector<8x36xf32> to vector<1x8x36xf32>
    tpu.vector_store %arg3[%c1_10, %c0_11, %c0_12], %12 {strides = array<i32>} : memref<4x8x36xf32, #tpu.memory_space<vmem>>, vector<1x8x36xf32>,
    %c2 = arith.constant 2 : index
    %c0_13 = arith.constant 0 : index
    %c0_14 = arith.constant 0 : index
    %13 = vector.load %arg2[%c2, %c0_13, %c0_14] : memref<4x36x36xf32, #tpu.memory_space<vmem>>, vector<1x36x36xf32>
    %14 = vector.shape_cast %13 : vector<1x36x36xf32> to vector<36x36xf32>
    %cst_15 = arith.constant dense<0.000000e+00> : vector<8x36xf32>
    %15 = tpu.matmul %0, %14, %cst_15 {dimension_numbers = #tpu.dot_dimension_numbers<[1], [0], [0], [1], [0, 0, 1, 1], [], []>} : vector<8x36xf32>, vector<36x36xf32>, vector<8x36xf32> -> vector<8x36xf32>
    %c2_16 = arith.constant 2 : index
    %c0_17 = arith.constant 0 : index
    %c0_18 = arith.constant 0 : index
    %16 = vector.load %arg3[%c2_16, %c0_17, %c0_18] : memref<4x8x36xf32, #tpu.memory_space<vmem>>, vector<1x8x36xf32>
    %17 = vector.shape_cast %16 : vector<1x8x36xf32> to vector<8x36xf32>
    %18 = vector.shape_cast %15 : vector<8x36xf32> to vector<1x8x36xf32>
    tpu.vector_store %arg3[%c2_16, %c0_17, %c0_18], %18 {strides = array<i32>} : memref<4x8x36xf32, #tpu.memory_space<vmem>>, vector<1x8x36xf32>,
    %c3 = arith.constant 3 : index
    %c0_19 = arith.constant 0 : index
    %c0_20 = arith.constant 0 : index
    %19 = vector.load %arg2[%c3, %c0_19, %c0_20] : memref<4x36x36xf32, #tpu.memory_space<vmem>>, vector<1x36x36xf32>
    %20 = vector.shape_cast %19 : vector<1x36x36xf32> to vector<36x36xf32>
    %cst_21 = arith.constant dense<0.000000e+00> : vector<8x36xf32>
    %21 = tpu.matmul %0, %20, %cst_21 {dimension_numbers = #tpu.dot_dimension_numbers<[1], [0], [0], [1], [0, 0, 1, 1], [], []>} : vector<8x36xf32>, vector<36x36xf32>, vector<8x36xf32> -> vector<8x36xf32>
    %c3_22 = arith.constant 3 : index
    %c0_23 = arith.constant 0 : index
    %c0_24 = arith.constant 0 : index
    %22 = vector.load %arg3[%c3_22, %c0_23, %c0_24] : memref<4x8x36xf32, #tpu.memory_space<vmem>>, vector<1x8x36xf32>
    %23 = vector.shape_cast %22 : vector<1x8x36xf32> to vector<8x36xf32>
    %24 = vector.shape_cast %21 : vector<8x36xf32> to vector<1x8x36xf32>
    tpu.vector_store %arg3[%c3_22, %c0_23, %c0_24], %24 {strides = array<i32>} : memref<4x8x36xf32, #tpu.memory_space<vmem>>, vector<1x8x36xf32>,
    return
  }
  func.func @transform_0(%arg0: i32) -> (i32, i32) {
    %c0_i32 = arith.constant 0 : i32
    %c0_i32_0 = arith.constant 0 : i32
    return %arg0, %c0_i32 : i32, i32
  }
  func.func @transform_1(%arg0: i32) -> (i32, i32, i32) {
    %c0_i32 = arith.constant 0 : i32
    %c0_i32_0 = arith.constant 0 : i32
    %c0_i32_1 = arith.constant 0 : i32
    %c0_i32_2 = arith.constant 0 : i32
    return %c0_i32, %c0_i32_0, %c0_i32_1 : i32, i32, i32
  }
  func.func @transform_2(%arg0: i32) -> (i32, i32, i32) {
    %c0_i32 = arith.constant 0 : i32
    %c0_i32_0 = arith.constant 0 : i32
    %c0_i32_1 = arith.constant 0 : i32
    return %c0_i32, %arg0, %c0_i32_0 : i32, i32, i32
  }
}

</mosaic_0001>

<llo_original>
// kernel: transform_feature_quaternion.1
$region0: #{transform_feature_quaternion.1}
  #allocation0 [shape = 'u32[]', space=smem, size = 0x4, offset = 0x4, fixed_abs, tag = 'smem constant byte address 0x4 - core index']
  #allocation1 [shape = 'u32[144,128]{1,0:T(1,128)}', space=vmem, size = 0x12000, scoped, tag = 'internal scratch']
  %s0 = inlined_call_operand.vmem [shape: f32[16,36], index: 0, kind: input, shape index: {}]
  %s1 = inlined_call_operand.vmem [shape: f32[4,36,36], index: 1, kind: input, shape index: {}]
  %s2 = inlined_call_operand.hbm [shape: f32[4,16,36], index: 2, kind: output, shape index: {}]
  %s3 = sld [smem:[#allocation0]]
  $region41: #{transform_feature_quaternion.1} parent=0
    _
  %s5 = ssub.s32 1, %s3
  %s6 = scalar_select 0, %s5, %s3
  $region1: #{transform_feature_quaternion.1} parent=0
    #allocation2 [shape = 'u8[32768]{0}', space=vmem, size = 0x8000, scoped, tag = 'output window, operand 0']
    #allocation3 [shape = 's32[2]{0}', space=sflag, size = 0x8, scoped, tag = 'scoped memory for transform_feature_quaternion.1']
    %7 = vsyncpa [#allocation3], 0
    %s8 = scalar_lea.sflag [#allocation3], 1
    %9 = vsyncpa %s8, 0
    loop: start=0, step=1, limit=4
    $region2: #{transform_feature_quaternion.1} parent=1 // loop_pre_header
      _
    $region3: #{transform_feature_quaternion.1} parent=1 // loop_header
      %s11 = sphi 0, %s15
      %p12 = scmp.ge.s32.totalorder %s11, 4
      %s21 = sphi 0, %s23
      %s24 = sphi 0, %s21
      %s25 = sphi 0, %s24
      %s41 = sphi 0, %s25
      %s45 = sphi 0, %s45
      %s47 = sphi 0, %s45
      %s48 = sphi 0, %s47
      %s62 = sphi 0, %s48
      %s68 = sphi 0, %s70
      %s71 = sphi 0, %s68
      %s72 = sphi 0, %s71
      %s88 = sphi 0, %s72
    $region4: #{transform_feature_quaternion.1} parent=1 // loop_header_branch
      %14 = sbr.rel (%p12) target = $region8
    $region5: #{transform_feature_quaternion.1} parent=1 // loop_body
      %s16 = ssub.s32 %s11, 1
      %s17 = ssub.s32 %s11, 2
      %s18 = sadd.s32 %s11, 1
      %s19 = ssub.s32 %s11, %s18
      %p20 = scmp.eq.s32.totalorder %s19, 0
      %s22 = sadd.s32 %s21, 1
      %s23 = scalar_select %p20, %s21, %s22
      %p26 = pneg %p20
      %p27 = scmp.eq.s32.totalorder %s11, 1
      %p28 = por %p26, %p27
      %p29 = scmp.ne.s32.totalorder %s21, %s24
      %p30 = scmp.eq.s32.totalorder %s11, 0
      %p31 = por %p29, %p30
      %p32 = scmp.ne.s32.totalorder %s21, %s24
      %p33 = scmp.eq.s32.totalorder %s16, 1
      %p34 = por %p32, %p33
      %p35 = scmp.ne.s32.totalorder %s24, %s25
      %p36 = scmp.eq.s32.totalorder %s16, 0
      %p37 = por %p35, %p36
      %p38 = scmp.ne.s32.totalorder %s24, %s25
      %p39 = scmp.eq.s32.totalorder %s17, 1
      %p40 = por %p38, %p39
      %p42 = scmp.ne.s32.totalorder %s25, %s41
      %p43 = scmp.eq.s32.totalorder %s17, 0
      %p44 = por %p42, %p43
      %s46 = sadd.s32 %s45, 1
      %p49 = scmp.eq.s32.totalorder %s11, 1
      %p50 = scmp.ne.s32.totalorder %s45, %s47
      %p51 = scmp.eq.s32.totalorder %s11, 0
      %p52 = por %p50, %p51
      %p53 = scmp.ne.s32.totalorder %s45, %s47
      %p54 = scmp.eq.s32.totalorder %s16, 1
      %p55 = por %p53, %p54
      %p56 = scmp.ne.s32.totalorder %s47, %s48
      %p57 = scmp.eq.s32.totalorder %s16, 0
      %p58 = por %p56, %p57
      %p59 = scmp.ne.s32.totalorder %s47, %s48
      %p60 = scmp.eq.s32.totalorder %s17, 1
      %p61 = por %p59, %p60
      %p63 = scmp.ne.s32.totalorder %s48, %s62
      %p64 = scmp.eq.s32.totalorder %s17, 0
      %p65 = por %p63, %p64
      %s66 = ssub.s32 %s11, %s18
      %p67 = scmp.eq.s32.totalorder %s66, 0
      %s69 = sadd.s32 %s68, 1
      %s70 = scalar_select %p67, %s68, %s69
      %p73 = pneg %p67
      %p74 = scmp.eq.s32.totalorder %s11, 1
      %p75 = por %p73, %p74
      %p76 = scmp.ne.s32.totalorder %s68, %s71
      %p77 = scmp.eq.s32.totalorder %s11, 0
      %p78 = por %p76, %p77
      %p79 = scmp.ne.s32.totalorder %s68, %s71
      %p80 = scmp.eq.s32.totalorder %s16, 1
      %p81 = por %p79, %p80
      %p82 = scmp.ne.s32.totalorder %s71, %s72
      %p83 = scmp.eq.s32.totalorder %s16, 0
      %p84 = por %p82, %p83
      %p85 = scmp.ne.s32.totalorder %s71, %s72
      %p86 = scmp.eq.s32.totalorder %s17, 1
      %p87 = por %p85, %p86
      %p89 = scmp.ne.s32.totalorder %s72, %s88
      %p90 = scmp.eq.s32.totalorder %s17, 0
      %p91 = por %p89, %p90
      %p92 = scmp.le.s32.totalorder 1, %s11
      %p93 = scmp.lt.s32.totalorder %s11, 3
      %p94 = pnand %p92, %p93
      %p95 = pneg %p94
      // Predicated region
      $region9: #{transform_feature_quaternion.1} parent=5 // pred_check
        _
      $region10: #{transform_feature_quaternion.1} parent=5 // pred_check_branch
        %97 = sbr.rel (%p94) target = $region12
      $region11: #{transform_feature_quaternion.1} parent=5 // pred_region
        %s98 = ssub.s32 %s11, 1
        // Predicated region
        $region13: #{transform_feature_quaternion.1} parent=11 // pred_check
          %p99 = pneg %p58
        $region14: #{transform_feature_quaternion.1} parent=11 // pred_check_branch
          %101 = sbr.rel (%p99) target = $region16
        $region15: #{transform_feature_quaternion.1} parent=11 // pred_region
          _
        $region16: #{transform_feature_quaternion.1} parent=11 // pred_fallthru
          _
      $region12: #{transform_feature_quaternion.1} parent=5 // pred_fallthru
        _
      %p102 = scmp.lt.s32.totalorder %s11, 2
      // Predicated region
      $region17: #{transform_feature_quaternion.1} parent=5 // pred_check
        %p103 = pneg %p102
      $region18: #{transform_feature_quaternion.1} parent=5 // pred_check_branch
        %105 = sbr.rel (%p103) target = $region20
      $region19: #{transform_feature_quaternion.1} parent=5 // pred_region
        // Predicated region
        $region21: #{transform_feature_quaternion.1} parent=19 // pred_check
          %p106 = pneg %p31
        $region22: #{transform_feature_quaternion.1} parent=19 // pred_check_branch
          %108 = sbr.rel (%p106) target = $region24
        $region23: #{transform_feature_quaternion.1} parent=19 // pred_region
          %p109 = scmp.lt.s32.totalorder %s11, 1
          %s110 = scalar_select %p109, %s11, 1
          %s111 = smul.addr %s110, 8
          %s112 = scalar_lea.vmem %s0, %s111
        $region24: #{transform_feature_quaternion.1} parent=19 // pred_fallthru
          _
      $region20: #{transform_feature_quaternion.1} parent=5 // pred_fallthru
        _
      %p113 = scmp.le.s32.totalorder 1, %s11
      %p114 = scmp.lt.s32.totalorder %s11, 3
      %p115 = pnand %p113, %p114
      %p116 = pneg %p115
      // Predicated region
      $region25: #{transform_feature_quaternion.1} parent=5 // pred_check
        _
      $region26: #{transform_feature_quaternion.1} parent=5 // pred_check_branch
        %118 = sbr.rel (%p115) target = $region28
      $region27: #{transform_feature_quaternion.1} parent=5 // pred_region
        %s119 = ssub.s32 %s11, 1
        %p120 = scmp.lt.s32.totalorder %s16, 1
        %s121 = scalar_select %p120, %s16, 1
        %s122 = smul.addr %s121, 8
        %s123 = scalar_lea.vmem %s0, %s122
        %p124 = pneg %p37
        %p125 = pneg %p34
        %p126 = pneg %p58
        %p127 = pneg %p55
        %p128 = pneg %p84
        %p129 = pneg %p81
        %s130 = sand.u32 %s71, 1
        %s131 = scalar_lea.sflag [#allocation3], %s130
        %s132 = sand.u32 %s71, 1
        %s133 = smul.addr %s132, 32
        %s134 = scalar_lea.vmem [#allocation2], %s133
        %p135 = scmp.lt.s32.totalorder %s16, 1
        %s136 = scalar_select %p135, %s16, 1
        %s137 = smul.addr %s136, 8
        %s138 = scalar_lea.vmem %s0, %s137
        %v139 = vld [vmem:[%s138] sm:$0xff]
        %v140 = vld [vmem:[%s1] sm:$0xff]
        %v141 = vld [vmem:[%s1 + $0x8] sm:$0xff]
        %v142 = vld [vmem:[%s1 + $0x10] sm:$0xff]
        %v143 = vld [vmem:[%s1 + $0x18] sm:$0xff]
        %v144 = vld [vmem:[%s1 + $0x20] sm:$0xf]
        %vm145 = vcmask 293888
        %v147 = vsel %vm145, %v139, 0
        %vm149 = vcmask 1043456
        %v151 = vsel %vm149, %v144, 0
        %153 = vmatprep.subr.mxu0 0.0
        %154 = vmatpush1.msra.mxu0 %v140
        %155 = vmatprep.subr.mxu0 0.0
        %156 = vmatpush1.msra.mxu0 %v141
        %157 = vmatprep.subr.mxu0 0.0
        %158 = vmatpush1.msra.mxu0 %v142
        %159 = vmatprep.subr.mxu0 0.0
        %160 = vmatpush1.msra.mxu0 %v143
        %161 = vmatprep.subr.mxu0 0.0
        %162 = vmatpush1.msra.mxu0 %v151
        %163 = vmatprep.subr.mxu0 0.0
        %164 = vmatpush1.msra.mxu0 0.0
        %165 = vmatprep.subr.mxu0 0.0
        %166 = vmatpush1.msra.mxu0 0.0
        %167 = vmatprep.subr.mxu0 0.0
        %168 = vmatpush1.msra.mxu0 0.0
        %169 = vmatprep.subr.mxu0 0.0
        %170 = vmatpush1.msra.mxu0 0.0
        %171 = vmatprep.subr.mxu0 0.0
        %172 = vmatpush1.msra.mxu0 0.0
        %173 = vmatprep.subr.mxu0 0.0
        %174 = vmatpush1.msra.mxu0 0.0
        %175 = vmatprep.subr.mxu0 0.0
        %176 = vmatpush1.msra.mxu0 0.0
        %177 = vmatprep.subr.mxu0 0.0
        %178 = vmatpush1.msra.mxu0 0.0
        %179 = vmatprep.subr.mxu0 0.0
        %180 = vmatpush1.msra.mxu0 0.0
        %181 = vmatprep.subr.mxu0 0.0
        %182 = vmatpush1.msra.mxu0 0.0
        %183 = vmatprep.subr.mxu0 0.0
        %184 = vmatpush1.msra.mxu0 0.0
        %185 = vmatprep.subr.mxu0 0.0
        %186 = vmatpush1.msra.mxu0 0.0
        %187 = vmatprep.subr.mxu0 0.0
        %188 = vmatpush1.msra.mxu0 0.0
        %189 = vmatprep.subr.mxu0 0.0
        %190 = vmatpush1.msra.mxu0 0.0
        %191 = vmatprep.subr.mxu0 0.0
        %192 = vmatpush1.msra.mxu0 0.0
        %193 = vmatprep.subr.mxu0 0.0
        %194 = vmatpush1.msra.mxu0 0.0
        %195 = vmatprep.subr.mxu0 0.0
        %196 = vmatpush1.msra.mxu0 0.0
        %197 = vmatprep.subr.mxu0 0.0
        %198 = vmatpush1.msra.mxu0 0.0
        %199 = vmatprep.subr.mxu0 0.0
        %200 = vmatpush1.msra.mxu0 0.0
        %201 = vmatprep.subr.mxu0 0.0
        %202 = vmatpush1.msra.mxu0 0.0
        %203 = vmatprep.subr.mxu0 0.0
        %204 = vmatpush1.msra.mxu0 0.0
        %205 = vmatprep.subr.mxu0 0.0
        %206 = vmatpush1.msra.mxu0 0.0
        %207 = vmatprep.subr.mxu0 0.0
        %208 = vmatpush1.msra.mxu0 0.0
        %209 = vmatprep.subr.mxu0 0.0
        %210 = vmatpush1.msra.mxu0 0.0
        %211 = vmatprep.subr.mxu0 0.0
        %212 = vmatpush1.msra.mxu0 0.0
        %213 = vmatprep.subr.mxu0 0.0
        %214 = vmatpush1.msra.mxu0 0.0
        %215 = vmatprep.subr.mxu0 0.0
        %216 = vmatpush1.msra.mxu0 0.0
        %217 = vmatprep.mubr.f32.mxu0 0.0
        %218 = vmatmul.mubr.f32.gmra.mrb[0].mxu0 %v147
        %v219 = vpop.f32.mrb[0].mxu0
        %v220 = vadd.f32 0.0, %v219
        %v221 = vpop.f32.mrb[0].mxu0
        %222 = vdwg.mxu0
        %223 = vst.msk [vmem:[%s134] sm:$0xff] %vm145, %v220
        %s224 = scalar_lea.vmem %s1, 40
        %v225 = vld [vmem:[%s224] sm:$0xff]
        %v226 = vld [vmem:[%s224 + $0x8] sm:$0xff]
        %v227 = vld [vmem:[%s224 + $0x10] sm:$0xff]
        %v228 = vld [vmem:[%s224 + $0x18] sm:$0xff]
        %v229 = vld [vmem:[%s224 + $0x20] sm:$0xf]
        %v231 = vsel %vm149, %v229, 0
        %233 = vmatprep.subr.mxu0 0.0
        %234 = vmatpush1.msra.mxu0 %v225
        %235 = vmatprep.subr.mxu0 0.0
        %236 = vmatpush1.msra.mxu0 %v226
        %237 = vmatprep.subr.mxu0 0.0
        %238 = vmatpush1.msra.mxu0 %v227
        %239 = vmatprep.subr.mxu0 0.0
        %240 = vmatpush1.msra.mxu0 %v228
        %241 = vmatprep.subr.mxu0 0.0
        %242 = vmatpush1.msra.mxu0 %v231
        %243 = vmatprep.subr.mxu0 0.0
        %244 = vmatpush1.msra.mxu0 0.0
        %245 = vmatprep.subr.mxu0 0.0
        %246 = vmatpush1.msra.mxu0 0.0
        %247 = vmatprep.subr.mxu0 0.0
        %248 = vmatpush1.msra.mxu0 0.0
        %249 = vmatprep.subr.mxu0 0.0
        %250 = vmatpush1.msra.mxu0 0.0
        %251 = vmatprep.subr.mxu0 0.0
        %252 = vmatpush1.msra.mxu0 0.0
        %253 = vmatprep.subr.mxu0 0.0
        %254 = vmatpush1.msra.mxu0 0.0
        %255 = vmatprep.subr.mxu0 0.0
        %256 = vmatpush1.msra.mxu0 0.0
        %257 = vmatprep.subr.mxu0 0.0
        %258 = vmatpush1.msra.mxu0 0.0
        %259 = vmatprep.subr.mxu0 0.0
        %260 = vmatpush1.msra.mxu0 0.0
        %261 = vmatprep.subr.mxu0 0.0
        %262 = vmatpush1.msra.mxu0 0.0
        %263 = vmatprep.subr.mxu0 0.0
        %264 = vmatpush1.msra.mxu0 0.0
        %265 = vmatprep.subr.mxu0 0.0
        %266 = vmatpush1.msra.mxu0 0.0
        %267 = vmatprep.subr.mxu0 0.0
        %268 = vmatpush1.msra.mxu0 0.0
        %269 = vmatprep.subr.mxu0 0.0
        %270 = vmatpush1.msra.mxu0 0.0
        %271 = vmatprep.subr.mxu0 0.0
        %272 = vmatpush1.msra.mxu0 0.0
        %273 = vmatprep.subr.mxu0 0.0
        %274 = vmatpush1.msra.mxu0 0.0
        %275 = vmatprep.subr.mxu0 0.0
        %276 = vmatpush1.msra.mxu0 0.0
        %277 = vmatprep.subr.mxu0 0.0
        %278 = vmatpush1.msra.mxu0 0.0
        %279 = vmatprep.subr.mxu0 0.0
        %280 = vmatpush1.msra.mxu0 0.0
        %281 = vmatprep.subr.mxu0 0.0
        %282 = vmatpush1.msra.mxu0 0.0
        %283 = vmatprep.subr.mxu0 0.0
        %284 = vmatpush1.msra.mxu0 0.0
        %285 = vmatprep.subr.mxu0 0.0
        %286 = vmatpush1.msra.mxu0 0.0
        %287 = vmatprep.subr.mxu0 0.0
        %288 = vmatpush1.msra.mxu0 0.0
        %289 = vmatprep.subr.mxu0 0.0
        %290 = vmatpush1.msra.mxu0 0.0
        %291 = vmatprep.subr.mxu0 0.0
        %292 = vmatpush1.msra.mxu0 0.0
        %293 = vmatprep.subr.mxu0 0.0
        %294 = vmatpush1.msra.mxu0 0.0
        %295 = vmatprep.subr.mxu0 0.0
        %296 = vmatpush1.msra.mxu0 0.0
        %297 = vmatprep.mubr.f32.mxu0 0.0
        %298 = vmatmul.mubr.f32.gmra.mrb[0].mxu0 %v147
        %v299 = vpop.f32.mrb[0].mxu0
        %v300 = vadd.f32 0.0, %v299
        %v301 = vpop.f32.mrb[0].mxu0
        %302 = vdwg.mxu0
        %s303 = scalar_lea.vmem %s134, 8 [#allocation2]
        %304 = vst.msk [vmem:[%s303] sm:$0xff] %vm145, %v300
        %s305 = scalar_lea.vmem %s1, 80
        %v306 = vld [vmem:[%s305] sm:$0xff]
        %v307 = vld [vmem:[%s305 + $0x8] sm:$0xff]
        %v308 = vld [vmem:[%s305 + $0x10] sm:$0xff]
        %v309 = vld [vmem:[%s305 + $0x18] sm:$0xff]
        %v310 = vld [vmem:[%s305 + $0x20] sm:$0xf]
        %v312 = vsel %vm149, %v310, 0
        %314 = vmatprep.subr.mxu0 0.0
        %315 = vmatpush1.msra.mxu0 %v306
        %316 = vmatprep.subr.mxu0 0.0
        %317 = vmatpush1.msra.mxu0 %v307
        %318 = vmatprep.subr.mxu0 0.0
        %319 = vmatpush1.msra.mxu0 %v308
        %320 = vmatprep.subr.mxu0 0.0
        %321 = vmatpush1.msra.mxu0 %v309
        %322 = vmatprep.subr.mxu0 0.0
        %323 = vmatpush1.msra.mxu0 %v312
        %324 = vmatprep.subr.mxu0 0.0
        %325 = vmatpush1.msra.mxu0 0.0
        %326 = vmatprep.subr.mxu0 0.0
        %327 = vmatpush1.msra.mxu0 0.0
        %328 = vmatprep.subr.mxu0 0.0
        %329 = vmatpush1.msra.mxu0 0.0
        %330 = vmatprep.subr.mxu0 0.0
        %331 = vmatpush1.msra.mxu0 0.0
        %332 = vmatprep.subr.mxu0 0.0
        %333 = vmatpush1.msra.mxu0 0.0
        %334 = vmatprep.subr.mxu0 0.0
        %335 = vmatpush1.msra.mxu0 0.0
        %336 = vmatprep.subr.mxu0 0.0
        %337 = vmatpush1.msra.mxu0 0.0
        %338 = vmatprep.subr.mxu0 0.0
        %339 = vmatpush1.msra.mxu0 0.0
        %340 = vmatprep.subr.mxu0 0.0
        %341 = vmatpush1.msra.mxu0 0.0
        %342 = vmatprep.subr.mxu0 0.0
        %343 = vmatpush1.msra.mxu0 0.0
        %344 = vmatprep.subr.mxu0 0.0
        %345 = vmatpush1.msra.mxu0 0.0
        %346 = vmatprep.subr.mxu0 0.0
        %347 = vmatpush1.msra.mxu0 0.0
        %348 = vmatprep.subr.mxu0 0.0
        %349 = vmatpush1.msra.mxu0 0.0
        %350 = vmatprep.subr.mxu0 0.0
        %351 = vmatpush1.msra.mxu0 0.0
        %352 = vmatprep.subr.mxu0 0.0
        %353 = vmatpush1.msra.mxu0 0.0
        %354 = vmatprep.subr.mxu0 0.0
        %355 = vmatpush1.msra.mxu0 0.0
        %356 = vmatprep.subr.mxu0 0.0
        %357 = vmatpush1.msra.mxu0 0.0
        %358 = vmatprep.subr.mxu0 0.0
        %359 = vmatpush1.msra.mxu0 0.0
        %360 = vmatprep.subr.mxu0 0.0
        %361 = vmatpush1.msra.mxu0 0.0
        %362 = vmatprep.subr.mxu0 0.0
        %363 = vmatpush1.msra.mxu0 0.0
        %364 = vmatprep.subr.mxu0 0.0
        %365 = vmatpush1.msra.mxu0 0.0
        %366 = vmatprep.subr.mxu0 0.0
        %367 = vmatpush1.msra.mxu0 0.0
        %368 = vmatprep.subr.mxu0 0.0
        %369 = vmatpush1.msra.mxu0 0.0
        %370 = vmatprep.subr.mxu0 0.0
        %371 = vmatpush1.msra.mxu0 0.0
        %372 = vmatprep.subr.mxu0 0.0
        %373 = vmatpush1.msra.mxu0 0.0
        %374 = vmatprep.subr.mxu0 0.0
        %375 = vmatpush1.msra.mxu0 0.0
        %376 = vmatprep.subr.mxu0 0.0
        %377 = vmatpush1.msra.mxu0 0.0
        %378 = vmatprep.mubr.f32.mxu0 0.0
        %379 = vmatmul.mubr.f32.gmra.mrb[0].mxu0 %v147
        %v380 = vpop.f32.mrb[0].mxu0
        %v381 = vadd.f32 0.0, %v380
        %v382 = vpop.f32.mrb[0].mxu0
        %383 = vdwg.mxu0
        %s384 = scalar_lea.vmem %s134, 16 [#allocation2]
        %385 = vst.msk [vmem:[%s384] sm:$0xff] %vm145, %v381
        %s386 = scalar_lea.vmem %s1, 120
        %v387 = vld [vmem:[%s386] sm:$0xff]
        %v388 = vld [vmem:[%s386 + $0x8] sm:$0xff]
        %v389 = vld [vmem:[%s386 + $0x10] sm:$0xff]
        %v390 = vld [vmem:[%s386 + $0x18] sm:$0xff]
        %v391 = vld [vmem:[%s386 + $0x20] sm:$0xf]
        %v393 = vsel %vm149, %v391, 0
        %395 = vmatprep.subr.mxu0 0.0
        %396 = vmatpush1.msra.mxu0 %v387
        %397 = vmatprep.subr.mxu0 0.0
        %398 = vmatpush1.msra.mxu0 %v388
        %399 = vmatprep.subr.mxu0 0.0
        %400 = vmatpush1.msra.mxu0 %v389
        %401 = vmatprep.subr.mxu0 0.0
        %402 = vmatpush1.msra.mxu0 %v390
        %403 = vmatprep.subr.mxu0 0.0
        %404 = vmatpush1.msra.mxu0 %v393
        %405 = vmatprep.subr.mxu0 0.0
        %406 = vmatpush1.msra.mxu0 0.0
        %407 = vmatprep.subr.mxu0 0.0
        %408 = vmatpush1.msra.mxu0 0.0
        %409 = vmatprep.subr.mxu0 0.0
        %410 = vmatpush1.msra.mxu0 0.0
        %411 = vmatprep.subr.mxu0 0.0
        %412 = vmatpush1.msra.mxu0 0.0
        %413 = vmatprep.subr.mxu0 0.0
        %414 = vmatpush1.msra.mxu0 0.0
        %415 = vmatprep.subr.mxu0 0.0
        %416 = vmatpush1.msra.mxu0 0.0
        %417 = vmatprep.subr.mxu0 0.0
        %418 = vmatpush1.msra.mxu0 0.0
        %419 = vmatprep.subr.mxu0 0.0
        %420 = vmatpush1.msra.mxu0 0.0
        %421 = vmatprep.subr.mxu0 0.0
        %422 = vmatpush1.msra.mxu0 0.0
        %423 = vmatprep.subr.mxu0 0.0
        %424 = vmatpush1.msra.mxu0 0.0
        %425 = vmatprep.subr.mxu0 0.0
        %426 = vmatpush1.msra.mxu0 0.0
        %427 = vmatprep.subr.mxu0 0.0
        %428 = vmatpush1.msra.mxu0 0.0
        %429 = vmatprep.subr.mxu0 0.0
        %430 = vmatpush1.msra.mxu0 0.0
        %431 = vmatprep.subr.mxu0 0.0
        %432 = vmatpush1.msra.mxu0 0.0
        %433 = vmatprep.subr.mxu0 0.0
        %434 = vmatpush1.msra.mxu0 0.0
        %435 = vmatprep.subr.mxu0 0.0
        %436 = vmatpush1.msra.mxu0 0.0
        %437 = vmatprep.subr.mxu0 0.0
        %438 = vmatpush1.msra.mxu0 0.0
        %439 = vmatprep.subr.mxu0 0.0
        %440 = vmatpush1.msra.mxu0 0.0
        %441 = vmatprep.subr.mxu0 0.0
        %442 = vmatpush1.msra.mxu0 0.0
        %443 = vmatprep.subr.mxu0 0.0
        %444 = vmatpush1.msra.mxu0 0.0
        %445 = vmatprep.subr.mxu0 0.0
        %446 = vmatpush1.msra.mxu0 0.0
        %447 = vmatprep.subr.mxu0 0.0
        %448 = vmatpush1.msra.mxu0 0.0
        %449 = vmatprep.subr.mxu0 0.0
        %450 = vmatpush1.msra.mxu0 0.0
        %451 = vmatprep.subr.mxu0 0.0
        %452 = vmatpush1.msra.mxu0 0.0
        %453 = vmatprep.subr.mxu0 0.0
        %454 = vmatpush1.msra.mxu0 0.0
        %455 = vmatprep.subr.mxu0 0.0
        %456 = vmatpush1.msra.mxu0 0.0
        %457 = vmatprep.subr.mxu0 0.0
        %458 = vmatpush1.msra.mxu0 0.0
        %459 = vmatprep.mubr.f32.mxu0 0.0
        %460 = vmatmul.mubr.f32.gmra.mrb[0].mxu0 %v147
        %v461 = vpop.f32.mrb[0].mxu0
        %v462 = vadd.f32 0.0, %v461
        %v463 = vpop.f32.mrb[0].mxu0
        %464 = vdwg.mxu0
        %s465 = scalar_lea.vmem %s134, 24 [#allocation2]
        %466 = vst.msk [vmem:[%s465] sm:$0xff] %vm145, %v462
        %s467 = sand.u32 %s71, 1
        %s468 = scalar_lea.sflag [#allocation3], %s467
        %s469 = sand.u32 %s71, 1
        %s470 = smul.addr %s469, 32
        %s471 = scalar_lea.vmem [#allocation2], %s470
        // Predicated region
        $region29: #{transform_feature_quaternion.1} parent=27 // pred_check
          %p472 = pneg %p81
        $region30: #{transform_feature_quaternion.1} parent=27 // pred_check_branch
          %474 = sbr.rel (%p472) target = $region32
        $region31: #{transform_feature_quaternion.1} parent=27 // pred_region
          %s476 = ssub.s32 512, 512
          %477 = vsyncadd %s468, %s476
          %s478 = smul.addr %s16, 128
          %s479 = scalar_lea.hbm %s2, %s478
          %s480 = sshll.u32 %s471, 4
          %s481 = int_to_ptr.vmem [resolvable:$true] %s480
          %486 = dma.vmem_to_hbm [thread:$0]  %s481, 512, %s479, %s468, 128, 256, 8
        $region32: #{transform_feature_quaternion.1} parent=27 // pred_fallthru
          _
      $region28: #{transform_feature_quaternion.1} parent=5 // pred_fallthru
        _
      %p487 = scmp.le.s32.totalorder 2, %s11
      // Predicated region
      $region33: #{transform_feature_quaternion.1} parent=5 // pred_check
        %p488 = pneg %p487
      $region34: #{transform_feature_quaternion.1} parent=5 // pred_check_branch
        %490 = sbr.rel (%p488) target = $region36
      $region35: #{transform_feature_quaternion.1} parent=5 // pred_region
        %s491 = ssub.s32 %s11, 2
        // Predicated region
        $region37: #{transform_feature_quaternion.1} parent=35 // pred_check
          %p492 = pneg %p87
        $region38: #{transform_feature_quaternion.1} parent=35 // pred_check_branch
          %494 = sbr.rel (%p492) target = $region40
        $region39: #{transform_feature_quaternion.1} parent=35 // pred_region
          %s495 = sand.u32 %s72, 1
          %s496 = scalar_lea.sflag [#allocation3], %s495
          %s497 = sand.u32 %s72, 1
          %s498 = smul.addr %s497, 32
          %s499 = scalar_lea.vmem [#allocation2], %s498
          %500 = dma.done %s496, 512
        $region40: #{transform_feature_quaternion.1} parent=35 // pred_fallthru
          _
      $region36: #{transform_feature_quaternion.1} parent=5 // pred_fallthru
        _
    $region6: #{transform_feature_quaternion.1} parent=1 // loop_footer
      %s15 = sadd.s32 1, %s11
    $region7: #{transform_feature_quaternion.1} parent=1 // loop_footer_branch
      %10 = sbr.rel target = $region3
    $region8: #{transform_feature_quaternion.1} parent=1 // loop_exit
      _
    %501 = vsyncpa [#allocation3], 1
    %s502 = scalar_lea.sflag [#allocation3], 1
    %503 = vsyncpa %s502, 1

</llo_original>
